<compile_context>
chip_gen: v7x
topology: tpu7x:2x2x1
jax: 0.10.0
libtpu: 0.0.40
codegen_flags: <defaults>
</compile_context>

<pallas_src>
import math

import jax
import jax.numpy as jnp
from jax import lax
from jax.experimental import pallas as pl
from jax.experimental.pallas import tpu as pltpu


def _round_up(a, m):
    return ((a + m - 1) // m) * m


def _padded_bytes(shape, itemsize):
    """Approx VMEM footprint of a 2-D block after (8, 128) tile padding."""
    r = _round_up(shape[0], 8)
    c = _round_up(shape[1], 128)
    return r * c * itemsize


def _make_kernel(n, ct, num_chunks, mlp_dtype):
    rows = ct * n
    f32 = jnp.float32

    def kernel(x_ref, w1_ref, b1_ref, w2_ref, b2_ref,
               e1_ref, mask_ref, summat_ref, bdmask_ref, tile_ref, itile_ref,
               out_ref):
        # ---- MLP hot path: bf16 MXU matmuls, f32 accumulation --------------
        h = jnp.maximum(
            jnp.dot(x_ref[...], w1_ref[...], preferred_element_type=f32)
            + b1_ref[...], 0.0)                                      # (bt, H) f32
        lf = jnp.dot(h.astype(mlp_dtype), w2_ref[...],
                     preferred_element_type=f32) + b2_ref[...]       # (bt, n*n) f32

        e1 = e1_ref[...]
        mask = mask_ref[...]
        summat = summat_ref[...]
        tile = tile_ref[...]
        itile = itile_ref[...]
        bdmask = bdmask_ref[...]

        # ---- unflatten + fused block-diagonal grams, <=128-row chunks ------
        for c in range(num_chunks):
            lf_c = lf[c * ct:(c + 1) * ct, :]                        # (ct, n*n)
            # m[s*n+i, j] = lf_c[s, i*n + j] via constant 0/1 matmuls
            # (MXU-only unflatten: zero XLU relayout traffic)
            repl = jnp.dot(e1, lf_c, preferred_element_type=f32)     # (ct*n, n*n)
            m = jnp.dot(repl * mask, summat,
                        preferred_element_type=f32)                  # (ct*n, n)
            # all ct grams of this chunk fused into one MXU call
            g = lax.dot_general(m, m, (((1,), (1,)), ((), ())),
                                preferred_element_type=f32)          # (ct*n, ct*n)
            if ct > 1:
                # keep only the per-sample (n, n) diagonal blocks
                a = jnp.dot(g * bdmask, tile,
                            preferred_element_type=f32)              # (ct*n, n)
            else:
                a = g                                                # single-sample gram
            out_ref[c * rows:(c + 1) * rows, :] = a + itile

    return kernel


def metric_forward(x, w1, b1, w2, b2, identity_fac_log, num_output,
                   *, mlp_dtype=jnp.bfloat16):
    f32 = jnp.float32
    B, F = x.shape
    H = w1.shape[1]
    n = int(num_output)
    n2 = n * n

    # ---- tile selection ----------------------------------------------------
    # ct: samples per fused-gram chunk, keeping the chunk gram <= ~128 rows
    # (MXU native on v5e, half of v6e/v7x; portable default).
    ct = max(1, 128 // n)
    if ct >= 8:
        ct -= ct % 8
    # bt must be a multiple of ct (chunking) and 16 (bf16 sublane packing).
    gran = ct * 16 // math.gcd(ct, 16)
    # Grow the MLP batch tile toward ~256 rows; cap unrolled chunk count.
    bt = gran
    while bt + gran <= 256 and (bt + gran) // ct <= 32:
        bt += gran
    B_g = _round_up(max(B, 1), gran)
    if bt >= B_g:
        if B_g >= 2 * gran:
            # >= 2 parallel grid steps so both v7x TensorCores get work.
            bt = _round_up((B_g + 1) // 2, gran)
        else:
            bt = B_g
    steps = math.ceil(B_g / bt)
    b_pad = steps * bt
    num_chunks = bt // ct

    # ---- operands ----------------------------------------------------------
    xp = x.astype(mlp_dtype)
    if b_pad != B:
        xp = jnp.pad(xp, ((0, b_pad - B), (0, 0)))
    w1c = w1.astype(mlp_dtype)
    w2c = w2.astype(mlp_dtype)
    b1c = b1.reshape(1, H).astype(f32)
    b2c = b2.reshape(1, n2).astype(f32)

    eye_n = jnp.eye(n, dtype=f32)
    eye_c = jnp.eye(ct, dtype=f32)
    e1 = jnp.repeat(eye_c, n, axis=0)                                # (ct*n, ct)
    mask = jnp.tile(jnp.repeat(eye_n, n, axis=1), (ct, 1))           # (ct*n, n*n)
    summat = jnp.tile(eye_n, (n, 1))                                 # (n*n, n)
    bdmask = jnp.repeat(jnp.repeat(eye_c, n, axis=0), n, axis=1)     # (ct*n, ct*n)
    tilemat = jnp.tile(eye_n, (ct, 1))                               # (ct*n, n)
    itile = jnp.exp(jnp.asarray(identity_fac_log, f32)) * tilemat    # exp(fac)*I tiles

    # ---- explicit VMEM budget (v5e scoped default is only 16 MiB) ----------
    isz = jnp.dtype(mlp_dtype).itemsize
    blocks = [((bt, F), isz), ((F, H), isz), ((1, H), 4), ((H, n2), isz),
              ((1, n2), 4), ((ct * n, ct), 4), ((ct * n, n2), 4),
              ((n2, n), 4), ((ct * n, ct * n), 4), ((ct * n, n), 4),
              ((ct * n, n), 4), ((bt * n, n), 4)]
    est = sum(2 * _padded_bytes(s, i) for s, i in blocks)            # double-buffered
    est += _padded_bytes((bt, n2), 4)                                # lf value
    est += num_chunks * (_padded_bytes((ct * n, n2), 4)
                         + _padded_bytes((ct * n, ct * n), 4))       # live chunk values
    vmem_limit = int(min(max(est + (8 << 20), 32 << 20), 128 << 20))

    const = lambda i: (0, 0)
    kernel = _make_kernel(n, ct, num_chunks, mlp_dtype)
    out2d = pl.pallas_call(
        kernel,
        out_shape=jax.ShapeDtypeStruct((b_pad * n, n), f32),
        grid=(steps,),
        in_specs=[
            pl.BlockSpec((bt, F), lambda i: (i, 0)),                 # x
            pl.BlockSpec((F, H), const),                             # w1
            pl.BlockSpec((1, H), const),                             # b1
            pl.BlockSpec((H, n2), const),                            # w2
            pl.BlockSpec((1, n2), const),                            # b2
            pl.BlockSpec((ct * n, ct), const),                       # e1
            pl.BlockSpec((ct * n, n2), const),                       # mask
            pl.BlockSpec((n2, n), const),                            # summat
            pl.BlockSpec((ct * n, ct * n), const),                   # bdmask
            pl.BlockSpec((ct * n, n), const),                        # tilemat
            pl.BlockSpec((ct * n, n), const),                        # itile
        ],
        out_specs=pl.BlockSpec((bt * n, n), lambda i: (i, 0)),
        compiler_params=pltpu.CompilerParams(
            dimension_semantics=("parallel",),
            vmem_limit_bytes=vmem_limit),
    )(xp, w1c, b1c, w2c, b2c, e1, mask, summat, bdmask, tilemat, itile)

    # Free metadata reshape in XLA (kernel output is a lane-dense 2-D slab).
    return out2d[: B * n].reshape(B, n, n)


def metric_ref(x, w1, b1, w2, b2, identity_fac_log, num_output):
    """Pure-JAX reference matching the PyTorch forward."""
    h = jnp.maximum(x @ w1 + b1, 0.0)
    Lf = h @ w2 + b2
    L = Lf.reshape(x.shape[0], num_output, num_output)
    A = jnp.einsum('bij,bkj->bik', L, L) \
        + jnp.exp(identity_fac_log) * jnp.eye(num_output, dtype=jnp.float32)
    return A


def init_params(key, num_features, num_output, num_hidden,
                identity_init=True, identity_init_scale=10.0):
    """Deterministic synthetic init mirroring nn.Linear default + identity_init."""
    k1, k2, k3, k4 = jax.random.split(key, 4)
    lim1 = 1.0 / jnp.sqrt(num_features)
    w1 = jax.random.uniform(k1, (num_features, num_hidden), jnp.float32, -lim1, lim1)
    b1 = jax.random.uniform(k2, (num_hidden,), jnp.float32, -lim1, lim1)
    lim2 = 1.0 / jnp.sqrt(num_hidden)
    w2 = jax.random.uniform(k3, (num_hidden, num_output * num_output),
                            jnp.float32, -lim2, lim2)
    b2 = jax.random.uniform(k4, (num_output * num_output,), jnp.float32, -lim2, lim2)
    if identity_init:
        w2 = w2 / identity_init_scale
        b2 = jnp.eye(num_output, dtype=jnp.float32).reshape(-1)
    identity_fac_log = jnp.zeros((), jnp.float32)
    return w1, b1, w2, b2, identity_fac_log


def _run_case(key, batch, num_features, num_hidden, num_output):
    kx, kp = jax.random.split(key)
    x = jax.random.normal(kx, (batch, num_features), jnp.float32)
    w1, b1, w2, b2, fac_log = init_params(
        kp, num_features, num_output, num_hidden,
        identity_init=True, identity_init_scale=10.0)
    ref = metric_ref(x, w1, b1, w2, b2, fac_log, num_output)

    # f32 MLP path: tight tolerance.
    out_f32 = jax.block_until_ready(
        metric_forward(x, w1, b1, w2, b2, fac_log, num_output,
                       mlp_dtype=jnp.float32))
    assert out_f32.shape == (batch, num_output, num_output)
    assert jnp.allclose(out_f32, ref, atol=1e-5, rtol=1e-5)

    # bf16 MLP path (default): relaxed tolerance (gram squares the bf16 error).
    out_bf16 = jax.block_until_ready(
        metric_forward(x, w1, b1, w2, b2, fac_log, num_output))
    assert out_bf16.shape == (batch, num_output, num_output)
    assert jnp.allclose(out_bf16, ref, atol=5e-2, rtol=5e-2)


if __name__ == "__main__":
    key = jax.random.PRNGKey(0)
    k1, k2 = jax.random.split(key)

    # Spec-sized tiny problem (single grid step, single chunk).
    _run_case(k1, batch=2, num_features=8, num_hidden=32, num_output=4)

    # Larger case exercising multi-step grid + multi-chunk loop + batch padding.
    _run_case(k2, batch=40, num_features=16, num_hidden=64, num_output=8)

    print("KERNEL_OK")
</pallas_src>

<mosaic_0001>
module attributes {stable_mosaic.version = 11 : i64} {
  func.func @kernel(%arg0: i32, %arg1: memref<32x8xf32, #tpu.memory_space<vmem>>, %arg2: memref<8x32xf32, #tpu.memory_space<vmem>>, %arg3: memref<1x32xf32, #tpu.memory_space<vmem>>, %arg4: memref<32x16xf32, #tpu.memory_space<vmem>>, %arg5: memref<1x16xf32, #tpu.memory_space<vmem>>, %arg6: memref<128x32xf32, #tpu.memory_space<vmem>>, %arg7: memref<128x16xf32, #tpu.memory_space<vmem>>, %arg8: memref<16x4xf32, #tpu.memory_space<vmem>>, %arg9: memref<128x128xf32, #tpu.memory_space<vmem>>, %arg10: memref<128x4xf32, #tpu.memory_space<vmem>>, %arg11: memref<128x4xf32, #tpu.memory_space<vmem>>, %arg12: memref<128x4xf32, #tpu.memory_space<vmem>>) attributes {dimension_semantics = [#tpu.dimension_semantics<parallel>], iteration_bounds = array<i64: 1>, scalar_prefetch = 0 : i64, scratch_operands = 0 : i64, tpu.core_type = #tpu.core_type<tc>, window_params = [{transform_indices = @transform_0, window_bounds = array<i64: 32, 8>}, {pipeline_mode = #tpu.pipeline_mode<synchronous>, transform_indices = @transform_1, window_bounds = array<i64: 8, 32>}, {pipeline_mode = #tpu.pipeline_mode<synchronous>, transform_indices = @transform_2, window_bounds = array<i64: 1, 32>}, {pipeline_mode = #tpu.pipeline_mode<synchronous>, transform_indices = @transform_3, window_bounds = array<i64: 32, 16>}, {pipeline_mode = #tpu.pipeline_mode<synchronous>, transform_indices = @transform_4, window_bounds = array<i64: 1, 16>}, {pipeline_mode = #tpu.pipeline_mode<synchronous>, transform_indices = @transform_5, window_bounds = array<i64: 128, 32>}, {pipeline_mode = #tpu.pipeline_mode<synchronous>, transform_indices = @transform_6, window_bounds = array<i64: 128, 16>}, {pipeline_mode = #tpu.pipeline_mode<synchronous>, transform_indices = @transform_7, window_bounds = array<i64: 16, 4>}, {pipeline_mode = #tpu.pipeline_mode<synchronous>, transform_indices = @transform_8, window_bounds = array<i64: 128, 128>}, {pipeline_mode = #tpu.pipeline_mode<synchronous>, transform_indices = @transform_9, window_bounds = array<i64: 128, 4>}, {pipeline_mode = #tpu.pipeline_mode<synchronous>, transform_indices = @transform_10, window_bounds = array<i64: 128, 4>}, {transform_indices = @transform_11, window_bounds = array<i64: 128, 4>}]} {
    %c0 = arith.constant 0 : index
    %c0_0 = arith.constant 0 : index
    %0 = vector.load %arg1[%c0, %c0_0] : memref<32x8xf32, #tpu.memory_space<vmem>>, vector<32x8xf32>
    %c0_1 = arith.constant 0 : index
    %c0_2 = arith.constant 0 : index
    %1 = vector.load %arg2[%c0_1, %c0_2] : memref<8x32xf32, #tpu.memory_space<vmem>>, vector<8x32xf32>
    %cst = arith.constant dense<0.000000e+00> : vector<32x32xf32>
    %2 = tpu.matmul %0, %1, %cst {dimension_numbers = #tpu.dot_dimension_numbers<[1], [0], [0], [1], [0, 0, 1, 1], [], []>} : vector<32x8xf32>, vector<8x32xf32>, vector<32x32xf32> -> vector<32x32xf32>
    %c0_3 = arith.constant 0 : index
    %c0_4 = arith.constant 0 : index
    %3 = vector.load %arg3[%c0_3, %c0_4] : memref<1x32xf32, #tpu.memory_space<vmem>>, vector<1x32xf32>
    %4 = vector.broadcast %3 : vector<1x32xf32> to vector<32x32xf32>
    %5 = arith.addf %2, %4 : vector<32x32xf32>
    %cst_5 = arith.constant 0.000000e+00 : f32
    %6 = vector.broadcast %cst_5 : f32 to vector<32x32xf32>
    %7 = arith.maximumf %5, %6 : vector<32x32xf32>
    %c0_6 = arith.constant 0 : index
    %c0_7 = arith.constant 0 : index
    %8 = vector.load %arg4[%c0_6, %c0_7] : memref<32x16xf32, #tpu.memory_space<vmem>>, vector<32x16xf32>
    %cst_8 = arith.constant dense<0.000000e+00> : vector<32x16xf32>
    %9 = tpu.matmul %7, %8, %cst_8 {dimension_numbers = #tpu.dot_dimension_numbers<[1], [0], [0], [1], [0, 0, 1, 1], [], []>} : vector<32x32xf32>, vector<32x16xf32>, vector<32x16xf32> -> vector<32x16xf32>
    %c0_9 = arith.constant 0 : index
    %c0_10 = arith.constant 0 : index
    %10 = vector.load %arg5[%c0_9, %c0_10] : memref<1x16xf32, #tpu.memory_space<vmem>>, vector<1x16xf32>
    %11 = vector.broadcast %10 : vector<1x16xf32> to vector<32x16xf32>
    %12 = arith.addf %9, %11 : vector<32x16xf32>
    %c0_11 = arith.constant 0 : index
    %c0_12 = arith.constant 0 : index
    %13 = vector.load %arg6[%c0_11, %c0_12] : memref<128x32xf32, #tpu.memory_space<vmem>>, vector<128x32xf32>
    %c0_13 = arith.constant 0 : index
    %c0_14 = arith.constant 0 : index
    %14 = vector.load %arg7[%c0_13, %c0_14] : memref<128x16xf32, #tpu.memory_space<vmem>>, vector<128x16xf32>
    %c0_15 = arith.constant 0 : index
    %c0_16 = arith.constant 0 : index
    %15 = vector.load %arg8[%c0_15, %c0_16] : memref<16x4xf32, #tpu.memory_space<vmem>>, vector<16x4xf32>
    %c0_17 = arith.constant 0 : index
    %c0_18 = arith.constant 0 : index
    %16 = vector.load %arg10[%c0_17, %c0_18] : memref<128x4xf32, #tpu.memory_space<vmem>>, vector<128x4xf32>
    %c0_19 = arith.constant 0 : index
    %c0_20 = arith.constant 0 : index
    %17 = vector.load %arg11[%c0_19, %c0_20] : memref<128x4xf32, #tpu.memory_space<vmem>>, vector<128x4xf32>
    %c0_21 = arith.constant 0 : index
    %c0_22 = arith.constant 0 : index
    %18 = vector.load %arg9[%c0_21, %c0_22] : memref<128x128xf32, #tpu.memory_space<vmem>>, vector<128x128xf32>
    %cst_23 = arith.constant dense<0.000000e+00> : vector<128x16xf32>
    %19 = tpu.matmul %13, %12, %cst_23 {dimension_numbers = #tpu.dot_dimension_numbers<[1], [0], [0], [1], [0, 0, 1, 1], [], []>} : vector<128x32xf32>, vector<32x16xf32>, vector<128x16xf32> -> vector<128x16xf32>
    %20 = arith.mulf %19, %14 : vector<128x16xf32>
    %cst_24 = arith.constant dense<0.000000e+00> : vector<128x4xf32>
    %21 = tpu.matmul %20, %15, %cst_24 {dimension_numbers = #tpu.dot_dimension_numbers<[1], [0], [0], [1], [0, 0, 1, 1], [], []>} : vector<128x16xf32>, vector<16x4xf32>, vector<128x4xf32> -> vector<128x4xf32>
    %cst_25 = arith.constant dense<0.000000e+00> : vector<128x128xf32>
    %22 = tpu.matmul %21, %21, %cst_25 {dimension_numbers = #tpu.dot_dimension_numbers<[1], [1], [0], [0], [0, 0, 1, 0], [], []>} : vector<128x4xf32>, vector<128x4xf32>, vector<128x128xf32> -> vector<128x128xf32>
    %23 = arith.mulf %22, %18 : vector<128x128xf32>
    %cst_26 = arith.constant dense<0.000000e+00> : vector<128x4xf32>
    %24 = tpu.matmul %23, %16, %cst_26 {dimension_numbers = #tpu.dot_dimension_numbers<[1], [0], [0], [1], [0, 0, 1, 1], [], []>} : vector<128x128xf32>, vector<128x4xf32>, vector<128x4xf32> -> vector<128x4xf32>
    %25 = arith.addf %24, %17 : vector<128x4xf32>
    %c0_27 = arith.constant 0 : index
    %c0_28 = arith.constant 0 : index
    %26 = vector.load %arg12[%c0_27, %c0_28] : memref<128x4xf32, #tpu.memory_space<vmem>>, vector<128x4xf32>
    tpu.vector_store %arg12[%c0_27, %c0_28], %25 {strides = array<i32>} : memref<128x4xf32, #tpu.memory_space<vmem>>, vector<128x4xf32>,
    return
  }
  func.func @transform_0(%arg0: i32) -> (i32, i32) {
    %c0_i32 = arith.constant 0 : i32
    %c0_i32_0 = arith.constant 0 : i32
    return %arg0, %c0_i32 : i32, i32
  }
  func.func @transform_1(%arg0: i32) -> (i32, i32) {
    %c0_i32 = arith.constant 0 : i32
    %c0_i32_0 = arith.constant 0 : i32
    %c0_i32_1 = arith.constant 0 : i32
    return %c0_i32, %c0_i32_0 : i32, i32
  }
  func.func @transform_2(%arg0: i32) -> (i32, i32) {
    %c0_i32 = arith.constant 0 : i32
    %c0_i32_0 = arith.constant 0 : i32
    %c0_i32_1 = arith.constant 0 : i32
    return %c0_i32, %c0_i32_0 : i32, i32
  }
  func.func @transform_3(%arg0: i32) -> (i32, i32) {
    %c0_i32 = arith.constant 0 : i32
    %c0_i32_0 = arith.constant 0 : i32
    %c0_i32_1 = arith.constant 0 : i32
    return %c0_i32, %c0_i32_0 : i32, i32
  }
  func.func @transform_4(%arg0: i32) -> (i32, i32) {
    %c0_i32 = arith.constant 0 : i32
    %c0_i32_0 = arith.constant 0 : i32
    %c0_i32_1 = arith.constant 0 : i32
    return %c0_i32, %c0_i32_0 : i32, i32
  }
  func.func @transform_5(%arg0: i32) -> (i32, i32) {
    %c0_i32 = arith.constant 0 : i32
    %c0_i32_0 = arith.constant 0 : i32
    %c0_i32_1 = arith.constant 0 : i32
    return %c0_i32, %c0_i32_0 : i32, i32
  }
  func.func @transform_6(%arg0: i32) -> (i32, i32) {
    %c0_i32 = arith.constant 0 : i32
    %c0_i32_0 = arith.constant 0 : i32
    %c0_i32_1 = arith.constant 0 : i32
    return %c0_i32, %c0_i32_0 : i32, i32
  }
  func.func @transform_7(%arg0: i32) -> (i32, i32) {
    %c0_i32 = arith.constant 0 : i32
    %c0_i32_0 = arith.constant 0 : i32
    %c0_i32_1 = arith.constant 0 : i32
    return %c0_i32, %c0_i32_0 : i32, i32
  }
  func.func @transform_8(%arg0: i32) -> (i32, i32) {
    %c0_i32 = arith.constant 0 : i32
    %c0_i32_0 = arith.constant 0 : i32
    %c0_i32_1 = arith.constant 0 : i32
    return %c0_i32, %c0_i32_0 : i32, i32
  }
  func.func @transform_9(%arg0: i32) -> (i32, i32) {
    %c0_i32 = arith.constant 0 : i32
    %c0_i32_0 = arith.constant 0 : i32
    %c0_i32_1 = arith.constant 0 : i32
    return %c0_i32, %c0_i32_0 : i32, i32
  }
  func.func @transform_10(%arg0: i32) -> (i32, i32) {
    %c0_i32 = arith.constant 0 : i32
    %c0_i32_0 = arith.constant 0 : i32
    %c0_i32_1 = arith.constant 0 : i32
    return %c0_i32, %c0_i32_0 : i32, i32
  }
  func.func @transform_11(%arg0: i32) -> (i32, i32) {
    %c0_i32 = arith.constant 0 : i32
    %c0_i32_0 = arith.constant 0 : i32
    return %arg0, %c0_i32 : i32, i32
  }
}

</mosaic_0001>

<llo_original>
// kernel: tpu_custom_call.1
$region0: #{tpu_custom_call.1}
  #allocation0 [shape = 'u32[]', space=smem, size = 0x4, offset = 0x4, fixed_abs, tag = 'smem constant byte address 0x4 - core index']
  #allocation1 [shape = 'u32[144,128]{1,0:T(1,128)}', space=vmem, size = 0x12000, scoped, tag = 'internal scratch']
  %s0 = inlined_call_operand.vmem [shape: f32[32,8], index: 0, kind: input, shape index: {}]
  %s1 = inlined_call_operand.vmem [shape: f32[8,32], index: 1, kind: input, shape index: {}]
  %s2 = inlined_call_operand.vmem [shape: f32[1,32], index: 2, kind: input, shape index: {}]
  %s3 = inlined_call_operand.vmem [shape: f32[32,16], index: 3, kind: input, shape index: {}]
  %s4 = inlined_call_operand.vmem [shape: f32[1,16], index: 4, kind: input, shape index: {}]
  %s5 = inlined_call_operand.vmem [shape: f32[128,32], index: 5, kind: input, shape index: {}]
  %s6 = inlined_call_operand.vmem [shape: f32[128,16], index: 6, kind: input, shape index: {}]
  %s7 = inlined_call_operand.vmem [shape: f32[16,4], index: 7, kind: input, shape index: {}]
  %s8 = inlined_call_operand.vmem [shape: f32[128,128], index: 8, kind: input, shape index: {}]
  %s9 = inlined_call_operand.vmem [shape: f32[128,4], index: 9, kind: input, shape index: {}]
  %s10 = inlined_call_operand.vmem [shape: f32[128,4], index: 10, kind: input, shape index: {}]
  %s11 = inlined_call_operand.vmem [shape: f32[128,4], index: 11, kind: output, shape index: {}]
  %s12 = sld [smem:[#allocation0]]
  $region54: #{tpu_custom_call.1} parent=0
    _
  %s14 = ssub.s32 1, %s12
  %s15 = scalar_select 0, %s14, %s12
  // Predicated region
  $region2: #{tpu_custom_call.1} parent=0 // pred_check
    _
  $region3: #{tpu_custom_call.1} parent=0 // pred_check_branch
    %17 = sbr.rel (0) target = $region5
  $region4: #{tpu_custom_call.1} parent=0 // pred_region
    _
  $region5: #{tpu_custom_call.1} parent=0 // pred_fallthru
    _
  // Predicated region
  $region6: #{tpu_custom_call.1} parent=0 // pred_check
    _
  $region7: #{tpu_custom_call.1} parent=0 // pred_check_branch
    %19 = sbr.rel (0) target = $region9
  $region8: #{tpu_custom_call.1} parent=0 // pred_region
    _
  $region9: #{tpu_custom_call.1} parent=0 // pred_fallthru
    _
  // Predicated region
  $region10: #{tpu_custom_call.1} parent=0 // pred_check
    _
  $region11: #{tpu_custom_call.1} parent=0 // pred_check_branch
    %21 = sbr.rel (0) target = $region13
  $region12: #{tpu_custom_call.1} parent=0 // pred_region
    _
  $region13: #{tpu_custom_call.1} parent=0 // pred_fallthru
    _
  // Predicated region
  $region14: #{tpu_custom_call.1} parent=0 // pred_check
    _
  $region15: #{tpu_custom_call.1} parent=0 // pred_check_branch
    %23 = sbr.rel (0) target = $region17
  $region16: #{tpu_custom_call.1} parent=0 // pred_region
    _
  $region17: #{tpu_custom_call.1} parent=0 // pred_fallthru
    _
  // Predicated region
  $region18: #{tpu_custom_call.1} parent=0 // pred_check
    _
  $region19: #{tpu_custom_call.1} parent=0 // pred_check_branch
    %25 = sbr.rel (0) target = $region21
  $region20: #{tpu_custom_call.1} parent=0 // pred_region
    _
  $region21: #{tpu_custom_call.1} parent=0 // pred_fallthru
    _
  // Predicated region
  $region22: #{tpu_custom_call.1} parent=0 // pred_check
    _
  $region23: #{tpu_custom_call.1} parent=0 // pred_check_branch
    %27 = sbr.rel (0) target = $region25
  $region24: #{tpu_custom_call.1} parent=0 // pred_region
    _
  $region25: #{tpu_custom_call.1} parent=0 // pred_fallthru
    _
  // Predicated region
  $region26: #{tpu_custom_call.1} parent=0 // pred_check
    _
  $region27: #{tpu_custom_call.1} parent=0 // pred_check_branch
    %29 = sbr.rel (0) target = $region29
  $region28: #{tpu_custom_call.1} parent=0 // pred_region
    _
  $region29: #{tpu_custom_call.1} parent=0 // pred_fallthru
    _
  // Predicated region
  $region30: #{tpu_custom_call.1} parent=0 // pred_check
    _
  $region31: #{tpu_custom_call.1} parent=0 // pred_check_branch
    %31 = sbr.rel (0) target = $region33
  $region32: #{tpu_custom_call.1} parent=0 // pred_region
    _
  $region33: #{tpu_custom_call.1} parent=0 // pred_fallthru
    _
  // Predicated region
  $region34: #{tpu_custom_call.1} parent=0 // pred_check
    _
  $region35: #{tpu_custom_call.1} parent=0 // pred_check_branch
    %33 = sbr.rel (0) target = $region37
  $region36: #{tpu_custom_call.1} parent=0 // pred_region
    _
  $region37: #{tpu_custom_call.1} parent=0 // pred_fallthru
    _
  // Predicated region
  $region38: #{tpu_custom_call.1} parent=0 // pred_check
    _
  $region39: #{tpu_custom_call.1} parent=0 // pred_check_branch
    %35 = sbr.rel (0) target = $region41
  $region40: #{tpu_custom_call.1} parent=0 // pred_region
    _
  $region41: #{tpu_custom_call.1} parent=0 // pred_fallthru
    _
  // Predicated region
  $region42: #{tpu_custom_call.1} parent=0 // pred_check
    _
  $region43: #{tpu_custom_call.1} parent=0 // pred_check_branch
    %37 = sbr.rel (0) target = $region45
  $region44: #{tpu_custom_call.1} parent=0 // pred_region
    _
  $region45: #{tpu_custom_call.1} parent=0 // pred_fallthru
    _
  %v38 = vld [vmem:[%s0] sm:$0xff]
  %v39 = vld [vmem:[%s0 + $0x8] sm:$0xff]
  %v40 = vld [vmem:[%s0 + $0x10] sm:$0xff]
  %v41 = vld [vmem:[%s0 + $0x18] sm:$0xff]
  %v42 = vld [vmem:[%s1] sm:$0xff]
  %v43 = vld [vmem:[%s2] sm:$0x1]
  %v45 = vlaneseq
  %v46 = vshrl.u32 %v45, 7
  %v47 = vsub.s32 0, %v46
  %v48 = vrot.slane %v43, %v47
  %vm50 = vcmask 64512
  %v52 = vsel %vm50, %v38, 0
  %v55 = vsel %vm50, %v39, 0
  %v58 = vsel %vm50, %v40, 0
  %v61 = vsel %vm50, %v41, 0
  %63 = vmatprep.subr.mxu0 0.0
  %64 = vmatpush1.msra.mxu0 %v42
  %65 = vmatprep.subr.mxu0 0.0
  %66 = vmatpush1.msra.mxu0 0.0
  %67 = vmatprep.subr.mxu0 0.0
  %68 = vmatpush1.msra.mxu0 0.0
  %69 = vmatprep.subr.mxu0 0.0
  %70 = vmatpush1.msra.mxu0 0.0
  %71 = vmatprep.subr.mxu0 0.0
  %72 = vmatpush1.msra.mxu0 0.0
  %73 = vmatprep.subr.mxu0 0.0
  %74 = vmatpush1.msra.mxu0 0.0
  %75 = vmatprep.subr.mxu0 0.0
  %76 = vmatpush1.msra.mxu0 0.0
  %77 = vmatprep.subr.mxu0 0.0
  %78 = vmatpush1.msra.mxu0 0.0
  %79 = vmatprep.subr.mxu0 0.0
  %80 = vmatpush1.msra.mxu0 0.0
  %81 = vmatprep.subr.mxu0 0.0
  %82 = vmatpush1.msra.mxu0 0.0
  %83 = vmatprep.subr.mxu0 0.0
  %84 = vmatpush1.msra.mxu0 0.0
  %85 = vmatprep.subr.mxu0 0.0
  %86 = vmatpush1.msra.mxu0 0.0
  %87 = vmatprep.subr.mxu0 0.0
  %88 = vmatpush1.msra.mxu0 0.0
  %89 = vmatprep.subr.mxu0 0.0
  %90 = vmatpush1.msra.mxu0 0.0
  %91 = vmatprep.subr.mxu0 0.0
  %92 = vmatpush1.msra.mxu0 0.0
  %93 = vmatprep.subr.mxu0 0.0
  %94 = vmatpush1.msra.mxu0 0.0
  %95 = vmatprep.subr.mxu0 0.0
  %96 = vmatpush1.msra.mxu0 0.0
  %97 = vmatprep.subr.mxu0 0.0
  %98 = vmatpush1.msra.mxu0 0.0
  %99 = vmatprep.subr.mxu0 0.0
  %100 = vmatpush1.msra.mxu0 0.0
  %101 = vmatprep.subr.mxu0 0.0
  %102 = vmatpush1.msra.mxu0 0.0
  %103 = vmatprep.subr.mxu0 0.0
  %104 = vmatpush1.msra.mxu0 0.0
  %105 = vmatprep.subr.mxu0 0.0
  %106 = vmatpush1.msra.mxu0 0.0
  %107 = vmatprep.subr.mxu0 0.0
  %108 = vmatpush1.msra.mxu0 0.0
  %109 = vmatprep.subr.mxu0 0.0
  %110 = vmatpush1.msra.mxu0 0.0
  %111 = vmatprep.subr.mxu0 0.0
  %112 = vmatpush1.msra.mxu0 0.0
  %113 = vmatprep.subr.mxu0 0.0
  %114 = vmatpush1.msra.mxu0 0.0
  %115 = vmatprep.subr.mxu0 0.0
  %116 = vmatpush1.msra.mxu0 0.0
  %117 = vmatprep.subr.mxu0 0.0
  %118 = vmatpush1.msra.mxu0 0.0
  %119 = vmatprep.subr.mxu0 0.0
  %120 = vmatpush1.msra.mxu0 0.0
  %121 = vmatprep.subr.mxu0 0.0
  %122 = vmatpush1.msra.mxu0 0.0
  %123 = vmatprep.subr.mxu0 0.0
  %124 = vmatpush1.msra.mxu0 0.0
  %125 = vmatprep.subr.mxu0 0.0
  %126 = vmatpush1.msra.mxu0 0.0
  %127 = vmatprep.mubr.f32.mxu0 0.0
  %128 = vmatmul.mubr.f32.gmra.mrb[0].mxu0 %v52
  %v129 = vpop.f32.mrb[0].mxu0
  %v130 = vadd.f32 %v48, %v129
  %v131 = vpop.f32.mrb[0].mxu0
  %132 = vmatprep.mubr.f32.mxu0 0.0
  %133 = vmatmul.mubr.f32.gmra.mrb[0].mxu0 %v55
  %v134 = vpop.f32.mrb[0].mxu0
  %v135 = vadd.f32 %v48, %v134
  %v136 = vpop.f32.mrb[0].mxu0
  %137 = vmatprep.mubr.f32.mxu0 0.0
  %138 = vmatmul.mubr.f32.gmra.mrb[0].mxu0 %v58
  %v139 = vpop.f32.mrb[0].mxu0
  %v140 = vadd.f32 %v48, %v139
  %v141 = vpop.f32.mrb[0].mxu0
  %142 = vmatprep.mubr.f32.mxu0 0.0
  %143 = vmatmul.mubr.f32.gmra.mrb[0].mxu0 %v61
  %v144 = vpop.f32.mrb[0].mxu0
  %v145 = vadd.f32 %v48, %v144
  %v146 = vpop.f32.mrb[0].mxu0
  %147 = vdwg.mxu0
  %v148 = vmax.f32 %v130, 0.0
  %v149 = vmax.f32 %v135, 0.0
  %v150 = vmax.f32 %v140, 0.0
  %v151 = vmax.f32 %v145, 0.0
  %v152 = vld [vmem:[%s3] sm:$0xff]
  %v153 = vld [vmem:[%s3 + $0x8] sm:$0xff]
  %v154 = vld [vmem:[%s3 + $0x10] sm:$0xff]
  %v155 = vld [vmem:[%s3 + $0x18] sm:$0xff]
  %v156 = vld [vmem:[%s4] sm:$0x1]
  %v158 = vlaneseq
  %v159 = vshrl.u32 %v158, 7
  %v160 = vsub.s32 0, %v159
  %v161 = vrot.slane %v156, %v160
  %vm163 = vcmask 261120
  %v165 = vsel %vm163, %v148, 0
  %v168 = vsel %vm163, %v149, 0
  %v171 = vsel %vm163, %v150, 0
  %v174 = vsel %vm163, %v151, 0
  %176 = vmatprep.subr.mxu0 0.0
  %177 = vmatpush1.msra.mxu0 %v152
  %178 = vmatprep.subr.mxu0 0.0
  %179 = vmatpush1.msra.mxu0 %v153
  %180 = vmatprep.subr.mxu0 0.0
  %181 = vmatpush1.msra.mxu0 %v154
  %182 = vmatprep.subr.mxu0 0.0
  %183 = vmatpush1.msra.mxu0 %v155
  %184 = vmatprep.subr.mxu0 0.0
  %185 = vmatpush1.msra.mxu0 0.0
  %186 = vmatprep.subr.mxu0 0.0
  %187 = vmatpush1.msra.mxu0 0.0
  %188 = vmatprep.subr.mxu0 0.0
  %189 = vmatpush1.msra.mxu0 0.0
  %190 = vmatprep.subr.mxu0 0.0
  %191 = vmatpush1.msra.mxu0 0.0
  %192 = vmatprep.subr.mxu0 0.0
  %193 = vmatpush1.msra.mxu0 0.0
  %194 = vmatprep.subr.mxu0 0.0
  %195 = vmatpush1.msra.mxu0 0.0
  %196 = vmatprep.subr.mxu0 0.0
  %197 = vmatpush1.msra.mxu0 0.0
  %198 = vmatprep.subr.mxu0 0.0
  %199 = vmatpush1.msra.mxu0 0.0
  %200 = vmatprep.subr.mxu0 0.0
  %201 = vmatpush1.msra.mxu0 0.0
  %202 = vmatprep.subr.mxu0 0.0
  %203 = vmatpush1.msra.mxu0 0.0
  %204 = vmatprep.subr.mxu0 0.0
  %205 = vmatpush1.msra.mxu0 0.0
  %206 = vmatprep.subr.mxu0 0.0
  %207 = vmatpush1.msra.mxu0 0.0
  %208 = vmatprep.subr.mxu0 0.0
  %209 = vmatpush1.msra.mxu0 0.0
  %210 = vmatprep.subr.mxu0 0.0
  %211 = vmatpush1.msra.mxu0 0.0
  %212 = vmatprep.subr.mxu0 0.0
  %213 = vmatpush1.msra.mxu0 0.0
  %214 = vmatprep.subr.mxu0 0.0
  %215 = vmatpush1.msra.mxu0 0.0
  %216 = vmatprep.subr.mxu0 0.0
  %217 = vmatpush1.msra.mxu0 0.0
  %218 = vmatprep.subr.mxu0 0.0
  %219 = vmatpush1.msra.mxu0 0.0
  %220 = vmatprep.subr.mxu0 0.0
  %221 = vmatpush1.msra.mxu0 0.0
  %222 = vmatprep.subr.mxu0 0.0
  %223 = vmatpush1.msra.mxu0 0.0
  %224 = vmatprep.subr.mxu0 0.0
  %225 = vmatpush1.msra.mxu0 0.0
  %226 = vmatprep.subr.mxu0 0.0
  %227 = vmatpush1.msra.mxu0 0.0
  %228 = vmatprep.subr.mxu0 0.0
  %229 = vmatpush1.msra.mxu0 0.0
  %230 = vmatprep.subr.mxu0 0.0
  %231 = vmatpush1.msra.mxu0 0.0
  %232 = vmatprep.subr.mxu0 0.0
  %233 = vmatpush1.msra.mxu0 0.0
  %234 = vmatprep.subr.mxu0 0.0
  %235 = vmatpush1.msra.mxu0 0.0
  %236 = vmatprep.subr.mxu0 0.0
  %237 = vmatpush1.msra.mxu0 0.0
  %238 = vmatprep.subr.mxu0 0.0
  %239 = vmatpush1.msra.mxu0 0.0
  %240 = vmatprep.mubr.f32.mxu0 0.0
  %241 = vmatmul.mubr.f32.gmra.mrb[0].mxu0 %v165
  %v242 = vpop.f32.mrb[0].mxu0
  %v243 = vadd.f32 %v161, %v242
  %v244 = vpop.f32.mrb[0].mxu0
  %245 = vmatprep.mubr.f32.mxu0 0.0
  %246 = vmatmul.mubr.f32.gmra.mrb[0].mxu0 %v168
  %v247 = vpop.f32.mrb[0].mxu0
  %v248 = vadd.f32 %v161, %v247
  %v249 = vpop.f32.mrb[0].mxu0
  %250 = vmatprep.mubr.f32.mxu0 0.0
  %251 = vmatmul.mubr.f32.gmra.mrb[0].mxu0 %v171
  %v252 = vpop.f32.mrb[0].mxu0
  %v253 = vadd.f32 %v161, %v252
  %v254 = vpop.f32.mrb[0].mxu0
  %255 = vmatprep.mubr.f32.mxu0 0.0
  %256 = vmatmul.mubr.f32.gmra.mrb[0].mxu0 %v174
  %v257 = vpop.f32.mrb[0].mxu0
  %v258 = vadd.f32 %v161, %v257
  %v259 = vpop.f32.mrb[0].mxu0
  %260 = vdwg.mxu0
  %v261 = vld [vmem:[%s5] sm:$0xff]
  %v262 = vld [vmem:[%s5 + $0x8] sm:$0xff]
  %v263 = vld [vmem:[%s5 + $0x10] sm:$0xff]
  %v264 = vld [vmem:[%s5 + $0x18] sm:$0xff]
  %v265 = vld [vmem:[%s5 + $0x20] sm:$0xff]
  %v266 = vld [vmem:[%s5 + $0x28] sm:$0xff]
  %v267 = vld [vmem:[%s5 + $0x30] sm:$0xff]
  %v268 = vld [vmem:[%s5 + $0x38] sm:$0xff]
  %v269 = vld [vmem:[%s5 + $0x40] sm:$0xff]
  %v270 = vld [vmem:[%s5 + $0x48] sm:$0xff]
  %v271 = vld [vmem:[%s5 + $0x50] sm:$0xff]
  %v272 = vld [vmem:[%s5 + $0x58] sm:$0xff]
  %v273 = vld [vmem:[%s5 + $0x60] sm:$0xff]
  %v274 = vld [vmem:[%s5 + $0x68] sm:$0xff]
  %v275 = vld [vmem:[%s5 + $0x70] sm:$0xff]
  %v276 = vld [vmem:[%s5 + $0x78] sm:$0xff]
  %v277 = vld [vmem:[%s6] sm:$0xff]
  %v278 = vld [vmem:[%s6 + $0x8] sm:$0xff]
  %v279 = vld [vmem:[%s6 + $0x10] sm:$0xff]
  %v280 = vld [vmem:[%s6 + $0x18] sm:$0xff]
  %v281 = vld [vmem:[%s6 + $0x20] sm:$0xff]
  %v282 = vld [vmem:[%s6 + $0x28] sm:$0xff]
  %v283 = vld [vmem:[%s6 + $0x30] sm:$0xff]
  %v284 = vld [vmem:[%s6 + $0x38] sm:$0xff]
  %v285 = vld [vmem:[%s6 + $0x40] sm:$0xff]
  %v286 = vld [vmem:[%s6 + $0x48] sm:$0xff]
  %v287 = vld [vmem:[%s6 + $0x50] sm:$0xff]
  %v288 = vld [vmem:[%s6 + $0x58] sm:$0xff]
  %v289 = vld [vmem:[%s6 + $0x60] sm:$0xff]
  %v290 = vld [vmem:[%s6 + $0x68] sm:$0xff]
  %v291 = vld [vmem:[%s6 + $0x70] sm:$0xff]
  %v292 = vld [vmem:[%s6 + $0x78] sm:$0xff]
  %v293 = vld [vmem:[%s7] sm:$0xff]
  %v294 = vld [vmem:[%s7 + $0x8] sm:$0xff]
  %v295 = vld [vmem:[%s9] sm:$0xff]
  %v296 = vld [vmem:[%s9 + $0x8] sm:$0xff]
  %v297 = vld [vmem:[%s9 + $0x10] sm:$0xff]
  %v298 = vld [vmem:[%s9 + $0x18] sm:$0xff]
  %v299 = vld [vmem:[%s9 + $0x20] sm:$0xff]
  %v300 = vld [vmem:[%s9 + $0x28] sm:$0xff]
  %v301 = vld [vmem:[%s9 + $0x30] sm:$0xff]
  %v302 = vld [vmem:[%s9 + $0x38] sm:$0xff]
  %v303 = vld [vmem:[%s9 + $0x40] sm:$0xff]
  %v304 = vld [vmem:[%s9 + $0x48] sm:$0xff]
  %v305 = vld [vmem:[%s9 + $0x50] sm:$0xff]
  %v306 = vld [vmem:[%s9 + $0x58] sm:$0xff]
  %v307 = vld [vmem:[%s9 + $0x60] sm:$0xff]
  %v308 = vld [vmem:[%s9 + $0x68] sm:$0xff]
  %v309 = vld [vmem:[%s9 + $0x70] sm:$0xff]
  %v310 = vld [vmem:[%s9 + $0x78] sm:$0xff]
  %v311 = vld [vmem:[%s10] sm:$0xff]
  %v312 = vld [vmem:[%s10 + $0x8] sm:$0xff]
  %v313 = vld [vmem:[%s10 + $0x10] sm:$0xff]
  %v314 = vld [vmem:[%s10 + $0x18] sm:$0xff]
  %v315 = vld [vmem:[%s10 + $0x20] sm:$0xff]
  %v316 = vld [vmem:[%s10 + $0x28] sm:$0xff]
  %v317 = vld [vmem:[%s10 + $0x30] sm:$0xff]
  %v318 = vld [vmem:[%s10 + $0x38] sm:$0xff]
  %v319 = vld [vmem:[%s10 + $0x40] sm:$0xff]
  %v320 = vld [vmem:[%s10 + $0x48] sm:$0xff]
  %v321 = vld [vmem:[%s10 + $0x50] sm:$0xff]
  %v322 = vld [vmem:[%s10 + $0x58] sm:$0xff]
  %v323 = vld [vmem:[%s10 + $0x60] sm:$0xff]
  %v324 = vld [vmem:[%s10 + $0x68] sm:$0xff]
  %v325 = vld [vmem:[%s10 + $0x70] sm:$0xff]
  %v326 = vld [vmem:[%s10 + $0x78] sm:$0xff]
  %v327 = vld [vmem:[%s8] sm:$0xff]
  %v328 = vld [vmem:[%s8 + $0x8] sm:$0xff]
  %v329 = vld [vmem:[%s8 + $0x10] sm:$0xff]
  %v330 = vld [vmem:[%s8 + $0x18] sm:$0xff]
  %v331 = vld [vmem:[%s8 + $0x20] sm:$0xff]
  %v332 = vld [vmem:[%s8 + $0x28] sm:$0xff]
  %v333 = vld [vmem:[%s8 + $0x30] sm:$0xff]
  %v334 = vld [vmem:[%s8 + $0x38] sm:$0xff]
  %v335 = vld [vmem:[%s8 + $0x40] sm:$0xff]
  %v336 = vld [vmem:[%s8 + $0x48] sm:$0xff]
  %v337 = vld [vmem:[%s8 + $0x50] sm:$0xff]
  %v338 = vld [vmem:[%s8 + $0x58] sm:$0xff]
  %v339 = vld [vmem:[%s8 + $0x60] sm:$0xff]
  %v340 = vld [vmem:[%s8 + $0x68] sm:$0xff]
  %v341 = vld [vmem:[%s8 + $0x70] sm:$0xff]
  %v342 = vld [vmem:[%s8 + $0x78] sm:$0xff]
  %v344 = vsel %vm163, %v261, 0
  %v347 = vsel %vm163, %v262, 0
  %v350 = vsel %vm163, %v263, 0
  %v353 = vsel %vm163, %v264, 0
  %v356 = vsel %vm163, %v265, 0
  %v359 = vsel %vm163, %v266, 0
  %v362 = vsel %vm163, %v267, 0
  %v365 = vsel %vm163, %v268, 0
  %v368 = vsel %vm163, %v269, 0
  %v371 = vsel %vm163, %v270, 0
  %v374 = vsel %vm163, %v271, 0
  %v377 = vsel %vm163, %v272, 0
  %v380 = vsel %vm163, %v273, 0
  %v383 = vsel %vm163, %v274, 0
  %v386 = vsel %vm163, %v275, 0
  %v389 = vsel %vm163, %v276, 0
  %391 = vmatprep.subr.mxu0 0.0
  %392 = vmatpush1.msra.mxu0 %v243
  %393 = vmatprep.subr.mxu0 0.0
  %394 = vmatpush1.msra.mxu0 %v248
  %395 = vmatprep.subr.mxu0 0.0
  %396 = vmatpush1.msra.mxu0 %v253
  %397 = vmatprep.subr.mxu0 0.0
  %398 = vmatpush1.msra.mxu0 %v258
  %399 = vmatprep.subr.mxu0 0.0
  %400 = vmatpush1.msra.mxu0 0.0
  %401 = vmatprep.subr.mxu0 0.0
  %402 = vmatpush1.msra.mxu0 0.0
  %403 = vmatprep.subr.mxu0 0.0
  %404 = vmatpush1.msra.mxu0 0.0
  %405 = vmatprep.subr.mxu0 0.0
  %406 = vmatpush1.msra.mxu0 0.0
  %407 = vmatprep.subr.mxu0 0.0
  %408 = vmatpush1.msra.mxu0 0.0
  %409 = vmatprep.subr.mxu0 0.0
  %410 = vmatpush1.msra.mxu0 0.0
  %411 = vmatprep.subr.mxu0 0.0
  %412 = vmatpush1.msra.mxu0 0.0
  %413 = vmatprep.subr.mxu0 0.0
  %414 = vmatpush1.msra.mxu0 0.0
  %415 = vmatprep.subr.mxu0 0.0
  %416 = vmatpush1.msra.mxu0 0.0
  %417 = vmatprep.subr.mxu0 0.0
  %418 = vmatpush1.msra.mxu0 0.0
  %419 = vmatprep.subr.mxu0 0.0
  %420 = vmatpush1.msra.mxu0 0.0
  %421 = vmatprep.subr.mxu0 0.0
  %422 = vmatpush1.msra.mxu0 0.0
  %423 = vmatprep.subr.mxu0 0.0
  %424 = vmatpush1.msra.mxu0 0.0
  %425 = vmatprep.subr.mxu0 0.0
  %426 = vmatpush1.msra.mxu0 0.0
  %427 = vmatprep.subr.mxu0 0.0
  %428 = vmatpush1.msra.mxu0 0.0
  %429 = vmatprep.subr.mxu0 0.0
  %430 = vmatpush1.msra.mxu0 0.0
  %431 = vmatprep.subr.mxu0 0.0
  %432 = vmatpush1.msra.mxu0 0.0
  %433 = vmatprep.subr.mxu0 0.0
  %434 = vmatpush1.msra.mxu0 0.0
  %435 = vmatprep.subr.mxu0 0.0
  %436 = vmatpush1.msra.mxu0 0.0
  %437 = vmatprep.subr.mxu0 0.0
  %438 = vmatpush1.msra.mxu0 0.0
  %439 = vmatprep.subr.mxu0 0.0
  %440 = vmatpush1.msra.mxu0 0.0
  %441 = vmatprep.subr.mxu0 0.0
  %442 = vmatpush1.msra.mxu0 0.0
  %443 = vmatprep.subr.mxu0 0.0
  %444 = vmatpush1.msra.mxu0 0.0
  %445 = vmatprep.subr.mxu0 0.0
  %446 = vmatpush1.msra.mxu0 0.0
  %447 = vmatprep.subr.mxu0 0.0
  %448 = vmatpush1.msra.mxu0 0.0
  %449 = vmatprep.subr.mxu0 0.0
  %450 = vmatpush1.msra.mxu0 0.0
  %451 = vmatprep.subr.mxu0 0.0
  %452 = vmatpush1.msra.mxu0 0.0
  %453 = vmatprep.subr.mxu0 0.0
  %454 = vmatpush1.msra.mxu0 0.0
  %455 = vmatprep.mubr.f32.mxu0 0.0
  %456 = vmatmul.mubr.f32.gmra.mrb[0].mxu0 %v344
  %v457 = vpop.f32.mrb[0].mxu0
  %v458 = vadd.f32 0.0, %v457
  %v459 = vpop.f32.mrb[0].mxu0
  %460 = vmatprep.mubr.f32.mxu0 0.0
  %461 = vmatmul.mubr.f32.gmra.mrb[0].mxu0 %v347
  %v462 = vpop.f32.mrb[0].mxu0
  %v463 = vadd.f32 0.0, %v462
  %v464 = vpop.f32.mrb[0].mxu0
  %465 = vmatprep.mubr.f32.mxu0 0.0
  %466 = vmatmul.mubr.f32.gmra.mrb[0].mxu0 %v350
  %v467 = vpop.f32.mrb[0].mxu0
  %v468 = vadd.f32 0.0, %v467
  %v469 = vpop.f32.mrb[0].mxu0
  %470 = vmatprep.mubr.f32.mxu0 0.0
  %471 = vmatmul.mubr.f32.gmra.mrb[0].mxu0 %v353
  %v472 = vpop.f32.mrb[0].mxu0
  %v473 = vadd.f32 0.0, %v472
  %v474 = vpop.f32.mrb[0].mxu0
  %475 = vmatprep.mubr.f32.mxu0 0.0
  %476 = vmatmul.mubr.f32.gmra.mrb[0].mxu0 %v356
  %v477 = vpop.f32.mrb[0].mxu0
  %v478 = vadd.f32 0.0, %v477
  %v479 = vpop.f32.mrb[0].mxu0
  %480 = vmatprep.mubr.f32.mxu0 0.0
  %481 = vmatmul.mubr.f32.gmra.mrb[0].mxu0 %v359
  %v482 = vpop.f32.mrb[0].mxu0
  %v483 = vadd.f32 0.0, %v482
  %v484 = vpop.f32.mrb[0].mxu0
  %485 = vmatprep.mubr.f32.mxu0 0.0
  %486 = vmatmul.mubr.f32.gmra.mrb[0].mxu0 %v362
  %v487 = vpop.f32.mrb[0].mxu0
  %v488 = vadd.f32 0.0, %v487
  %v489 = vpop.f32.mrb[0].mxu0
  %490 = vmatprep.mubr.f32.mxu0 0.0
  %491 = vmatmul.mubr.f32.gmra.mrb[0].mxu0 %v365
  %v492 = vpop.f32.mrb[0].mxu0
  %v493 = vadd.f32 0.0, %v492
  %v494 = vpop.f32.mrb[0].mxu0
  %495 = vmatprep.mubr.f32.mxu0 0.0
  %496 = vmatmul.mubr.f32.gmra.mrb[0].mxu0 %v368
  %v497 = vpop.f32.mrb[0].mxu0
  %v498 = vadd.f32 0.0, %v497
  %v499 = vpop.f32.mrb[0].mxu0
  %500 = vmatprep.mubr.f32.mxu0 0.0
  %501 = vmatmul.mubr.f32.gmra.mrb[0].mxu0 %v371
  %v502 = vpop.f32.mrb[0].mxu0
  %v503 = vadd.f32 0.0, %v502
  %v504 = vpop.f32.mrb[0].mxu0
  %505 = vmatprep.mubr.f32.mxu0 0.0
  %506 = vmatmul.mubr.f32.gmra.mrb[0].mxu0 %v374
  %v507 = vpop.f32.mrb[0].mxu0
  %v508 = vadd.f32 0.0, %v507
  %v509 = vpop.f32.mrb[0].mxu0
  %510 = vmatprep.mubr.f32.mxu0 0.0
  %511 = vmatmul.mubr.f32.gmra.mrb[0].mxu0 %v377
  %v512 = vpop.f32.mrb[0].mxu0
  %v513 = vadd.f32 0.0, %v512
  %v514 = vpop.f32.mrb[0].mxu0
  %515 = vmatprep.mubr.f32.mxu0 0.0
  %516 = vmatmul.mubr.f32.gmra.mrb[0].mxu0 %v380
  %v517 = vpop.f32.mrb[0].mxu0
  %v518 = vadd.f32 0.0, %v517
  %v519 = vpop.f32.mrb[0].mxu0
  %520 = vmatprep.mubr.f32.mxu0 0.0
  %521 = vmatmul.mubr.f32.gmra.mrb[0].mxu0 %v383
  %v522 = vpop.f32.mrb[0].mxu0
  %v523 = vadd.f32 0.0, %v522
  %v524 = vpop.f32.mrb[0].mxu0
  %525 = vmatprep.mubr.f32.mxu0 0.0
  %526 = vmatmul.mubr.f32.gmra.mrb[0].mxu0 %v386
  %v527 = vpop.f32.mrb[0].mxu0
  %v528 = vadd.f32 0.0, %v527
  %v529 = vpop.f32.mrb[0].mxu0
  %530 = vmatprep.mubr.f32.mxu0 0.0
  %531 = vmatmul.mubr.f32.gmra.mrb[0].mxu0 %v389
  %v532 = vpop.f32.mrb[0].mxu0
  %v533 = vadd.f32 0.0, %v532
  %v534 = vpop.f32.mrb[0].mxu0
  %535 = vdwg.mxu0
  %v536 = vmul.f32 %v458, %v277
  %v537 = vmul.f32 %v463, %v278
  %v538 = vmul.f32 %v468, %v279
  %v539 = vmul.f32 %v473, %v280
  %v540 = vmul.f32 %v478, %v281
  %v541 = vmul.f32 %v483, %v282
  %v542 = vmul.f32 %v488, %v283
  %v543 = vmul.f32 %v493, %v284
  %v544 = vmul.f32 %v498, %v285
  %v545 = vmul.f32 %v503, %v286
  %v546 = vmul.f32 %v508, %v287
  %v547 = vmul.f32 %v513, %v288
  %v548 = vmul.f32 %v518, %v289
  %v549 = vmul.f32 %v523, %v290
  %v550 = vmul.f32 %v528, %v291
  %v551 = vmul.f32 %v533, %v292
  %vm552 = vcmask 130048
  %v554 = vsel %vm552, %v536, 0
  %v557 = vsel %vm552, %v537, 0
  %v560 = vsel %vm552, %v538, 0
  %v563 = vsel %vm552, %v539, 0
  %v566 = vsel %vm552, %v540, 0
  %v569 = vsel %vm552, %v541, 0
  %v572 = vsel %vm552, %v542, 0
  %v575 = vsel %vm552, %v543, 0
  %v578 = vsel %vm552, %v544, 0
  %v581 = vsel %vm552, %v545, 0
  %v584 = vsel %vm552, %v546, 0
  %v587 = vsel %vm552, %v547, 0
  %v590 = vsel %vm552, %v548, 0
  %v593 = vsel %vm552, %v549, 0
  %v596 = vsel %vm552, %v550, 0
  %v599 = vsel %vm552, %v551, 0
  %601 = vmatprep.subr.mxu0 0.0
  %602 = vmatpush1.msra.mxu0 %v293
  %603 = vmatprep.subr.mxu0 0.0
  %604 = vmatpush1.msra.mxu0 %v294
  %605 = vmatprep.subr.mxu0 0.0
  %606 = vmatpush1.msra.mxu0 0.0
  %607 = vmatprep.subr.mxu0 0.0
  %608 = vmatpush1.msra.mxu0 0.0
  %609 = vmatprep.subr.mxu0 0.0
  %610 = vmatpush1.msra.mxu0 0.0
  %611 = vmatprep.subr.mxu0 0.0
  %612 = vmatpush1.msra.mxu0 0.0
  %613 = vmatprep.subr.mxu0 0.0
  %614 = vmatpush1.msra.mxu0 0.0
  %615 = vmatprep.subr.mxu0 0.0
  %616 = vmatpush1.msra.mxu0 0.0
  %617 = vmatprep.subr.mxu0 0.0
  %618 = vmatpush1.msra.mxu0 0.0
  %619 = vmatprep.subr.mxu0 0.0
  %620 = vmatpush1.msra.mxu0 0.0
  %621 = vmatprep.subr.mxu0 0.0
  %622 = vmatpush1.msra.mxu0 0.0
  %623 = vmatprep.subr.mxu0 0.0
  %624 = vmatpush1.msra.mxu0 0.0
  %625 = vmatprep.subr.mxu0 0.0
  %626 = vmatpush1.msra.mxu0 0.0
  %627 = vmatprep.subr.mxu0 0.0
  %628 = vmatpush1.msra.mxu0 0.0
  %629 = vmatprep.subr.mxu0 0.0
  %630 = vmatpush1.msra.mxu0 0.0
  %631 = vmatprep.subr.mxu0 0.0
  %632 = vmatpush1.msra.mxu0 0.0
  %633 = vmatprep.subr.mxu0 0.0
  %634 = vmatpush1.msra.mxu0 0.0
  %635 = vmatprep.subr.mxu0 0.0
  %636 = vmatpush1.msra.mxu0 0.0
  %637 = vmatprep.subr.mxu0 0.0
  %638 = vmatpush1.msra.mxu0 0.0
  %639 = vmatprep.subr.mxu0 0.0
  %640 = vmatpush1.msra.mxu0 0.0
  %641 = vmatprep.subr.mxu0 0.0
  %642 = vmatpush1.msra.mxu0 0.0
  %643 = vmatprep.subr.mxu0 0.0
  %644 = vmatpush1.msra.mxu0 0.0
  %645 = vmatprep.subr.mxu0 0.0
  %646 = vmatpush1.msra.mxu0 0.0
  %647 = vmatprep.subr.mxu0 0.0
  %648 = vmatpush1.msra.mxu0 0.0
  %649 = vmatprep.subr.mxu0 0.0
  %650 = vmatpush1.msra.mxu0 0.0
  %651 = vmatprep.subr.mxu0 0.0
  %652 = vmatpush1.msra.mxu0 0.0
  %653 = vmatprep.subr.mxu0 0.0
  %654 = vmatpush1.msra.mxu0 0.0
  %655 = vmatprep.subr.mxu0 0.0
  %656 = vmatpush1.msra.mxu0 0.0
  %657 = vmatprep.subr.mxu0 0.0
  %658 = vmatpush1.msra.mxu0 0.0
  %659 = vmatprep.subr.mxu0 0.0
  %660 = vmatpush1.msra.mxu0 0.0
  %661 = vmatprep.subr.mxu0 0.0
  %662 = vmatpush1.msra.mxu0 0.0
  %663 = vmatprep.subr.mxu0 0.0
  %664 = vmatpush1.msra.mxu0 0.0
  %665 = vmatprep.mubr.f32.mxu0 0.0
  %666 = vmatmul.mubr.f32.gmra.mrb[0].mxu0 %v554
  %v667 = vpop.f32.mrb[0].mxu0
  %v668 = vadd.f32 0.0, %v667
  %v669 = vpop.f32.mrb[0].mxu0
  %670 = vmatprep.mubr.f32.mxu0 0.0
  %671 = vmatmul.mubr.f32.gmra.mrb[0].mxu0 %v557
  %v672 = vpop.f32.mrb[0].mxu0
  %v673 = vadd.f32 0.0, %v672
  %v674 = vpop.f32.mrb[0].mxu0
  %675 = vmatprep.mubr.f32.mxu0 0.0
  %676 = vmatmul.mubr.f32.gmra.mrb[0].mxu0 %v560
  %v677 = vpop.f32.mrb[0].mxu0
  %v678 = vadd.f32 0.0, %v677
  %v679 = vpop.f32.mrb[0].mxu0
  %680 = vmatprep.mubr.f32.mxu0 0.0
  %681 = vmatmul.mubr.f32.gmra.mrb[0].mxu0 %v563
  %v682 = vpop.f32.mrb[0].mxu0
  %v683 = vadd.f32 0.0, %v682
  %v684 = vpop.f32.mrb[0].mxu0
  %685 = vmatprep.mubr.f32.mxu0 0.0
  %686 = vmatmul.mubr.f32.gmra.mrb[0].mxu0 %v566
  %v687 = vpop.f32.mrb[0].mxu0
  %v688 = vadd.f32 0.0, %v687
  %v689 = vpop.f32.mrb[0].mxu0
  %690 = vmatprep.mubr.f32.mxu0 0.0
  %691 = vmatmul.mubr.f32.gmra.mrb[0].mxu0 %v569
  %v692 = vpop.f32.mrb[0].mxu0
  %v693 = vadd.f32 0.0, %v692
  %v694 = vpop.f32.mrb[0].mxu0
  %695 = vmatprep.mubr.f32.mxu0 0.0
  %696 = vmatmul.mubr.f32.gmra.mrb[0].mxu0 %v572
  %v697 = vpop.f32.mrb[0].mxu0
  %v698 = vadd.f32 0.0, %v697
  %v699 = vpop.f32.mrb[0].mxu0
  %700 = vmatprep.mubr.f32.mxu0 0.0
  %701 = vmatmul.mubr.f32.gmra.mrb[0].mxu0 %v575
  %v702 = vpop.f32.mrb[0].mxu0
  %v703 = vadd.f32 0.0, %v702
  %v704 = vpop.f32.mrb[0].mxu0
  %705 = vmatprep.mubr.f32.mxu0 0.0
  %706 = vmatmul.mubr.f32.gmra.mrb[0].mxu0 %v578
  %v707 = vpop.f32.mrb[0].mxu0
  %v708 = vadd.f32 0.0, %v707
  %v709 = vpop.f32.mrb[0].mxu0
  %710 = vmatprep.mubr.f32.mxu0 0.0
  %711 = vmatmul.mubr.f32.gmra.mrb[0].mxu0 %v581
  %v712 = vpop.f32.mrb[0].mxu0
  %v713 = vadd.f32 0.0, %v712
  %v714 = vpop.f32.mrb[0].mxu0
  %715 = vmatprep.mubr.f32.mxu0 0.0
  %716 = vmatmul.mubr.f32.gmra.mrb[0].mxu0 %v584
  %v717 = vpop.f32.mrb[0].mxu0
  %v718 = vadd.f32 0.0, %v717
  %v719 = vpop.f32.mrb[0].mxu0
  %720 = vmatprep.mubr.f32.mxu0 0.0
  %721 = vmatmul.mubr.f32.gmra.mrb[0].mxu0 %v587
  %v722 = vpop.f32.mrb[0].mxu0
  %v723 = vadd.f32 0.0, %v722
  %v724 = vpop.f32.mrb[0].mxu0
  %725 = vmatprep.mubr.f32.mxu0 0.0
  %726 = vmatmul.mubr.f32.gmra.mrb[0].mxu0 %v590
  %v727 = vpop.f32.mrb[0].mxu0
  %v728 = vadd.f32 0.0, %v727
  %v729 = vpop.f32.mrb[0].mxu0
  %730 = vmatprep.mubr.f32.mxu0 0.0
  %731 = vmatmul.mubr.f32.gmra.mrb[0].mxu0 %v593
  %v732 = vpop.f32.mrb[0].mxu0
  %v733 = vadd.f32 0.0, %v732
  %v734 = vpop.f32.mrb[0].mxu0
  %735 = vmatprep.mubr.f32.mxu0 0.0
  %736 = vmatmul.mubr.f32.gmra.mrb[0].mxu0 %v596
  %v737 = vpop.f32.mrb[0].mxu0
  %v738 = vadd.f32 0.0, %v737
  %v739 = vpop.f32.mrb[0].mxu0
  %740 = vmatprep.mubr.f32.mxu0 0.0
  %741 = vmatmul.mubr.f32.gmra.mrb[0].mxu0 %v599
  %v742 = vpop.f32.mrb[0].mxu0
  %v743 = vadd.f32 0.0, %v742
  %v744 = vpop.f32.mrb[0].mxu0
  %745 = vdwg.mxu0
  %vm746 = vcmask 31744
  %v748 = vsel %vm746, %v668, 0
  %v751 = vsel %vm746, %v673, 0
  %v754 = vsel %vm746, %v678, 0
  %v757 = vsel %vm746, %v683, 0
  %v760 = vsel %vm746, %v688, 0
  %v763 = vsel %vm746, %v693, 0
  %v766 = vsel %vm746, %v698, 0
  %v769 = vsel %vm746, %v703, 0
  %v772 = vsel %vm746, %v708, 0
  %v775 = vsel %vm746, %v713, 0
  %v778 = vsel %vm746, %v718, 0
  %v781 = vsel %vm746, %v723, 0
  %v784 = vsel %vm746, %v728, 0
  %v787 = vsel %vm746, %v733, 0
  %v790 = vsel %vm746, %v738, 0
  %v793 = vsel %vm746, %v743, 0
  %795 = vmatprep.subr.mxu0 0.0
  %796 = vmatpush1.xpose.msra.mxu0 %v748
  %797 = vmatprep.subr.mxu0 0.0
  %798 = vmatpush1.xpose.msra.mxu0 %v751
  %799 = vmatprep.subr.mxu0 0.0
  %800 = vmatpush1.xpose.msra.mxu0 %v754
  %801 = vmatprep.subr.mxu0 0.0
  %802 = vmatpush1.xpose.msra.mxu0 %v757
  %803 = vmatprep.subr.mxu0 0.0
  %804 = vmatpush1.xpose.msra.mxu0 %v760
  %805 = vmatprep.subr.mxu0 0.0
  %806 = vmatpush1.xpose.msra.mxu0 %v763
  %807 = vmatprep.subr.mxu0 0.0
  %808 = vmatpush1.xpose.msra.mxu0 %v766
  %809 = vmatprep.subr.mxu0 0.0
  %810 = vmatpush1.xpose.msra.mxu0 %v769
  %811 = vmatprep.subr.mxu0 0.0
  %812 = vmatpush1.xpose.msra.mxu0 %v772
  %813 = vmatprep.subr.mxu0 0.0
  %814 = vmatpush1.xpose.msra.mxu0 %v775
  %815 = vmatprep.subr.mxu0 0.0
  %816 = vmatpush1.xpose.msra.mxu0 %v778
  %817 = vmatprep.subr.mxu0 0.0
  %818 = vmatpush1.xpose.msra.mxu0 %v781
  %819 = vmatprep.subr.mxu0 0.0
  %820 = vmatpush1.xpose.msra.mxu0 %v784
  %821 = vmatprep.subr.mxu0 0.0
  %822 = vmatpush1.xpose.msra.mxu0 %v787
  %823 = vmatprep.subr.mxu0 0.0
  %824 = vmatpush1.xpose.msra.mxu0 %v790
  %825 = vmatprep.subr.mxu0 0.0
  %826 = vmatpush1.xpose.msra.mxu0 %v793
  %827 = vmatprep.subr.mxu0 0.0
  %828 = vmatpush1.xpose.msra.mxu0 0.0
  %829 = vmatprep.subr.mxu0 0.0
  %830 = vmatpush1.xpose.msra.mxu0 0.0
  %831 = vmatprep.subr.mxu0 0.0
  %832 = vmatpush1.xpose.msra.mxu0 0.0
  %833 = vmatprep.subr.mxu0 0.0
  %834 = vmatpush1.xpose.msra.mxu0 0.0
  %835 = vmatprep.subr.mxu0 0.0
  %836 = vmatpush1.xpose.msra.mxu0 0.0
  %837 = vmatprep.subr.mxu0 0.0
  %838 = vmatpush1.xpose.msra.mxu0 0.0
  %839 = vmatprep.subr.mxu0 0.0
  %840 = vmatpush1.xpose.msra.mxu0 0.0
  %841 = vmatprep.subr.mxu0 0.0
  %842 = vmatpush1.xpose.msra.mxu0 0.0
  %843 = vmatprep.subr.mxu0 0.0
  %844 = vmatpush1.xpose.msra.mxu0 0.0
  %845 = vmatprep.subr.mxu0 0.0
  %846 = vmatpush1.xpose.msra.mxu0 0.0
  %847 = vmatprep.subr.mxu0 0.0
  %848 = vmatpush1.xpose.msra.mxu0 0.0
  %849 = vmatprep.subr.mxu0 0.0
  %850 = vmatpush1.xpose.msra.mxu0 0.0
  %851 = vmatprep.subr.mxu0 0.0
  %852 = vmatpush1.xpose.msra.mxu0 0.0
  %853 = vmatprep.subr.mxu0 0.0
  %854 = vmatpush1.xpose.msra.mxu0 0.0
  %855 = vmatprep.subr.mxu0 0.0
  %856 = vmatpush1.xpose.msra.mxu0 0.0
  %857 = vmatprep.subr.mxu0 0.0
  %858 = vmatpush1.xpose.msra.mxu0 0.0
  %859 = vmatprep.mubr.f32.mxu0 0.0
  %860 = vmatmul.mubr.f32.gmra.mrb[0].mxu0 %v748
  %v861 = vpop.f32.mrb[0].mxu0
  %v862 = vadd.f32 0.0, %v861
  %v863 = vpop.f32.mrb[0].mxu0
  %864 = vmatprep.mubr.f32.mxu0 0.0
  %865 = vmatmul.mubr.f32.gmra.mrb[0].mxu0 %v751
  %v866 = vpop.f32.mrb[0].mxu0
  %v867 = vadd.f32 0.0, %v866
  %v868 = vpop.f32.mrb[0].mxu0
  %869 = vmatprep.mubr.f32.mxu0 0.0
  %870 = vmatmul.mubr.f32.gmra.mrb[0].mxu0 %v754
  %v871 = vpop.f32.mrb[0].mxu0
  %v872 = vadd.f32 0.0, %v871
  %v873 = vpop.f32.mrb[0].mxu0
  %874 = vmatprep.mubr.f32.mxu0 0.0
  %875 = vmatmul.mubr.f32.gmra.mrb[0].mxu0 %v757
  %v876 = vpop.f32.mrb[0].mxu0
  %v877 = vadd.f32 0.0, %v876
  %v878 = vpop.f32.mrb[0].mxu0
  %879 = vmatprep.mubr.f32.mxu0 0.0
  %880 = vmatmul.mubr.f32.gmra.mrb[0].mxu0 %v760
  %v881 = vpop.f32.mrb[0].mxu0
  %v882 = vadd.f32 0.0, %v881
  %v883 = vpop.f32.mrb[0].mxu0
  %884 = vmatprep.mubr.f32.mxu0 0.0
  %885 = vmatmul.mubr.f32.gmra.mrb[0].mxu0 %v763
  %v886 = vpop.f32.mrb[0].mxu0
  %v887 = vadd.f32 0.0, %v886
  %v888 = vpop.f32.mrb[0].mxu0
  %889 = vmatprep.mubr.f32.mxu0 0.0
  %890 = vmatmul.mubr.f32.gmra.mrb[0].mxu0 %v766
  %v891 = vpop.f32.mrb[0].mxu0
  %v892 = vadd.f32 0.0, %v891
  %v893 = vpop.f32.mrb[0].mxu0
  %894 = vmatprep.mubr.f32.mxu0 0.0
  %895 = vmatmul.mubr.f32.gmra.mrb[0].mxu0 %v769
  %v896 = vpop.f32.mrb[0].mxu0
  %v897 = vadd.f32 0.0, %v896
  %v898 = vpop.f32.mrb[0].mxu0
  %899 = vmatprep.mubr.f32.mxu0 0.0
  %900 = vmatmul.mubr.f32.gmra.mrb[0].mxu0 %v772
  %v901 = vpop.f32.mrb[0].mxu0
  %v902 = vadd.f32 0.0, %v901
  %v903 = vpop.f32.mrb[0].mxu0
  %904 = vmatprep.mubr.f32.mxu0 0.0
  %905 = vmatmul.mubr.f32.gmra.mrb[0].mxu0 %v775
  %v906 = vpop.f32.mrb[0].mxu0
  %v907 = vadd.f32 0.0, %v906
  %v908 = vpop.f32.mrb[0].mxu0
  %909 = vmatprep.mubr.f32.mxu0 0.0
  %910 = vmatmul.mubr.f32.gmra.mrb[0].mxu0 %v778
  %v911 = vpop.f32.mrb[0].mxu0
  %v912 = vadd.f32 0.0, %v911
  %v913 = vpop.f32.mrb[0].mxu0
  %914 = vmatprep.mubr.f32.mxu0 0.0
  %915 = vmatmul.mubr.f32.gmra.mrb[0].mxu0 %v781
  %v916 = vpop.f32.mrb[0].mxu0
  %v917 = vadd.f32 0.0, %v916
  %v918 = vpop.f32.mrb[0].mxu0
  %919 = vmatprep.mubr.f32.mxu0 0.0
  %920 = vmatmul.mubr.f32.gmra.mrb[0].mxu0 %v784
  %v921 = vpop.f32.mrb[0].mxu0
  %v922 = vadd.f32 0.0, %v921
  %v923 = vpop.f32.mrb[0].mxu0
  %924 = vmatprep.mubr.f32.mxu0 0.0
  %925 = vmatmul.mubr.f32.gmra.mrb[0].mxu0 %v787
  %v926 = vpop.f32.mrb[0].mxu0
  %v927 = vadd.f32 0.0, %v926
  %v928 = vpop.f32.mrb[0].mxu0
  %929 = vmatprep.mubr.f32.mxu0 0.0
  %930 = vmatmul.mubr.f32.gmra.mrb[0].mxu0 %v790
  %v931 = vpop.f32.mrb[0].mxu0
  %v932 = vadd.f32 0.0, %v931
  %v933 = vpop.f32.mrb[0].mxu0
  %934 = vmatprep.mubr.f32.mxu0 0.0
  %935 = vmatmul.mubr.f32.gmra.mrb[0].mxu0 %v793
  %v936 = vpop.f32.mrb[0].mxu0
  %v937 = vadd.f32 0.0, %v936
  %v938 = vpop.f32.mrb[0].mxu0
  %939 = vdwg.mxu0
  %v940 = vmul.f32 %v862, %v327
  %v941 = vmul.f32 %v867, %v328
  %v942 = vmul.f32 %v872, %v329
  %v943 = vmul.f32 %v877, %v330
  %v944 = vmul.f32 %v882, %v331
  %v945 = vmul.f32 %v887, %v332
  %v946 = vmul.f32 %v892, %v333
  %v947 = vmul.f32 %v897, %v334
  %v948 = vmul.f32 %v902, %v335
  %v949 = vmul.f32 %v907, %v336
  %v950 = vmul.f32 %v912, %v337
  %v951 = vmul.f32 %v917, %v338
  %v952 = vmul.f32 %v922, %v339
  %v953 = vmul.f32 %v927, %v340
  %v954 = vmul.f32 %v932, %v341
  %v955 = vmul.f32 %v937, %v342
  %956 = vmatprep.subr.mxu0 0.0
  %957 = vmatpush1.msra.mxu0 %v295
  %958 = vmatprep.subr.mxu0 0.0
  %959 = vmatpush1.msra.mxu0 %v296
  %960 = vmatprep.subr.mxu0 0.0
  %961 = vmatpush1.msra.mxu0 %v297
  %962 = vmatprep.subr.mxu0 0.0
  %963 = vmatpush1.msra.mxu0 %v298
  %964 = vmatprep.subr.mxu0 0.0
  %965 = vmatpush1.msra.mxu0 %v299
  %966 = vmatprep.subr.mxu0 0.0
  %967 = vmatpush1.msra.mxu0 %v300
  %968 = vmatprep.subr.mxu0 0.0
  %969 = vmatpush1.msra.mxu0 %v301
  %970 = vmatprep.subr.mxu0 0.0
  %971 = vmatpush1.msra.mxu0 %v302
  %972 = vmatprep.subr.mxu0 0.0
  %973 = vmatpush1.msra.mxu0 %v303
  %974 = vmatprep.subr.mxu0 0.0
  %975 = vmatpush1.msra.mxu0 %v304
  %976 = vmatprep.subr.mxu0 0.0
  %977 = vmatpush1.msra.mxu0 %v305
  %978 = vmatprep.subr.mxu0 0.0
  %979 = vmatpush1.msra.mxu0 %v306
  %980 = vmatprep.subr.mxu0 0.0
  %981 = vmatpush1.msra.mxu0 %v307
  %982 = vmatprep.subr.mxu0 0.0
  %983 = vmatpush1.msra.mxu0 %v308
  %984 = vmatprep.subr.mxu0 0.0
  %985 = vmatpush1.msra.mxu0 %v309
  %986 = vmatprep.subr.mxu0 0.0
  %987 = vmatpush1.msra.mxu0 %v310
  %988 = vmatprep.subr.mxu0 0.0
  %989 = vmatpush1.msra.mxu0 0.0
  %990 = vmatprep.subr.mxu0 0.0
  %991 = vmatpush1.msra.mxu0 0.0
  %992 = vmatprep.subr.mxu0 0.0
  %993 = vmatpush1.msra.mxu0 0.0
  %994 = vmatprep.subr.mxu0 0.0
  %995 = vmatpush1.msra.mxu0 0.0
  %996 = vmatprep.subr.mxu0 0.0
  %997 = vmatpush1.msra.mxu0 0.0
  %998 = vmatprep.subr.mxu0 0.0
  %999 = vmatpush1.msra.mxu0 0.0
  %1000 = vmatprep.subr.mxu0 0.0
  %1001 = vmatpush1.msra.mxu0 0.0
  %1002 = vmatprep.subr.mxu0 0.0
  %1003 = vmatpush1.msra.mxu0 0.0
  %1004 = vmatprep.subr.mxu0 0.0
  %1005 = vmatpush1.msra.mxu0 0.0
  %1006 = vmatprep.subr.mxu0 0.0
  %1007 = vmatpush1.msra.mxu0 0.0
  %1008 = vmatprep.subr.mxu0 0.0
  %1009 = vmatpush1.msra.mxu0 0.0
  %1010 = vmatprep.subr.mxu0 0.0
  %1011 = vmatpush1.msra.mxu0 0.0
  %1012 = vmatprep.subr.mxu0 0.0
  %1013 = vmatpush1.msra.mxu0 0.0
  %1014 = vmatprep.subr.mxu0 0.0
  %1015 = vmatpush1.msra.mxu0 0.0
  %1016 = vmatprep.subr.mxu0 0.0
  %1017 = vmatpush1.msra.mxu0 0.0
  %1018 = vmatprep.subr.mxu0 0.0
  %1019 = vmatpush1.msra.mxu0 0.0
  %1020 = vmatprep.mubr.f32.mxu0 0.0
  %1021 = vmatmul.mubr.f32.gmra.mrb[0].mxu0 %v940
  %v1022 = vpop.f32.mrb[0].mxu0
  %v1023 = vadd.f32 %v311, %v1022
  %v1024 = vpop.f32.mrb[0].mxu0
  %1025 = vmatprep.mubr.f32.mxu0 0.0
  %1026 = vmatmul.mubr.f32.gmra.mrb[0].mxu0 %v941
  %v1027 = vpop.f32.mrb[0].mxu0
  %v1028 = vadd.f32 %v312, %v1027
  %v1029 = vpop.f32.mrb[0].mxu0
  %1030 = vmatprep.mubr.f32.mxu0 0.0
  %1031 = vmatmul.mubr.f32.gmra.mrb[0].mxu0 %v942
  %v1032 = vpop.f32.mrb[0].mxu0
  %v1033 = vadd.f32 %v313, %v1032
  %v1034 = vpop.f32.mrb[0].mxu0
  %1035 = vmatprep.mubr.f32.mxu0 0.0
  %1036 = vmatmul.mubr.f32.gmra.mrb[0].mxu0 %v943
  %v1037 = vpop.f32.mrb[0].mxu0
  %v1038 = vadd.f32 %v314, %v1037
  %v1039 = vpop.f32.mrb[0].mxu0
  %1040 = vmatprep.mubr.f32.mxu0 0.0
  %1041 = vmatmul.mubr.f32.gmra.mrb[0].mxu0 %v944
  %v1042 = vpop.f32.mrb[0].mxu0
  %v1043 = vadd.f32 %v315, %v1042
  %v1044 = vpop.f32.mrb[0].mxu0
  %1045 = vmatprep.mubr.f32.mxu0 0.0
  %1046 = vmatmul.mubr.f32.gmra.mrb[0].mxu0 %v945
  %v1047 = vpop.f32.mrb[0].mxu0
  %v1048 = vadd.f32 %v316, %v1047
  %v1049 = vpop.f32.mrb[0].mxu0
  %1050 = vmatprep.mubr.f32.mxu0 0.0
  %1051 = vmatmul.mubr.f32.gmra.mrb[0].mxu0 %v946
  %v1052 = vpop.f32.mrb[0].mxu0
  %v1053 = vadd.f32 %v317, %v1052
  %v1054 = vpop.f32.mrb[0].mxu0
  %1055 = vmatprep.mubr.f32.mxu0 0.0
  %1056 = vmatmul.mubr.f32.gmra.mrb[0].mxu0 %v947
  %v1057 = vpop.f32.mrb[0].mxu0
  %v1058 = vadd.f32 %v318, %v1057
  %v1059 = vpop.f32.mrb[0].mxu0
  %1060 = vmatprep.mubr.f32.mxu0 0.0
  %1061 = vmatmul.mubr.f32.gmra.mrb[0].mxu0 %v948
  %v1062 = vpop.f32.mrb[0].mxu0
  %v1063 = vadd.f32 %v319, %v1062
  %v1064 = vpop.f32.mrb[0].mxu0
  %1065 = vmatprep.mubr.f32.mxu0 0.0
  %1066 = vmatmul.mubr.f32.gmra.mrb[0].mxu0 %v949
  %v1067 = vpop.f32.mrb[0].mxu0
  %v1068 = vadd.f32 %v320, %v1067
  %v1069 = vpop.f32.mrb[0].mxu0
  %1070 = vmatprep.mubr.f32.mxu0 0.0
  %1071 = vmatmul.mubr.f32.gmra.mrb[0].mxu0 %v950
  %v1072 = vpop.f32.mrb[0].mxu0
  %v1073 = vadd.f32 %v321, %v1072
  %v1074 = vpop.f32.mrb[0].mxu0
  %1075 = vmatprep.mubr.f32.mxu0 0.0
  %1076 = vmatmul.mubr.f32.gmra.mrb[0].mxu0 %v951
  %v1077 = vpop.f32.mrb[0].mxu0
  %v1078 = vadd.f32 %v322, %v1077
  %v1079 = vpop.f32.mrb[0].mxu0
  %1080 = vmatprep.mubr.f32.mxu0 0.0
  %1081 = vmatmul.mubr.f32.gmra.mrb[0].mxu0 %v952
  %v1082 = vpop.f32.mrb[0].mxu0
  %v1083 = vadd.f32 %v323, %v1082
  %v1084 = vpop.f32.mrb[0].mxu0
  %1085 = vmatprep.mubr.f32.mxu0 0.0
  %1086 = vmatmul.mubr.f32.gmra.mrb[0].mxu0 %v953
  %v1087 = vpop.f32.mrb[0].mxu0
  %v1088 = vadd.f32 %v324, %v1087
  %v1089 = vpop.f32.mrb[0].mxu0
  %1090 = vmatprep.mubr.f32.mxu0 0.0
  %1091 = vmatmul.mubr.f32.gmra.mrb[0].mxu0 %v954
  %v1092 = vpop.f32.mrb[0].mxu0
  %v1093 = vadd.f32 %v325, %v1092
  %v1094 = vpop.f32.mrb[0].mxu0
  %1095 = vmatprep.mubr.f32.mxu0 0.0
  %1096 = vmatmul.mubr.f32.gmra.mrb[0].mxu0 %v955
  %v1097 = vpop.f32.mrb[0].mxu0
  %v1098 = vadd.f32 %v326, %v1097
  %v1099 = vpop.f32.mrb[0].mxu0
  %1100 = vdwg.mxu0
  %1101 = vst.msk [vmem:[%s11] sm:$0xff] %vm746, %v1023
  %1102 = vst.msk [vmem:[%s11 + $0x8] sm:$0xff] %vm746, %v1028
  %1103 = vst.msk [vmem:[%s11 + $0x10] sm:$0xff] %vm746, %v1033
  %1104 = vst.msk [vmem:[%s11 + $0x18] sm:$0xff] %vm746, %v1038
  %1105 = vst.msk [vmem:[%s11 + $0x20] sm:$0xff] %vm746, %v1043
  %1106 = vst.msk [vmem:[%s11 + $0x28] sm:$0xff] %vm746, %v1048
  %1107 = vst.msk [vmem:[%s11 + $0x30] sm:$0xff] %vm746, %v1053
  %1108 = vst.msk [vmem:[%s11 + $0x38] sm:$0xff] %vm746, %v1058
  %1109 = vst.msk [vmem:[%s11 + $0x40] sm:$0xff] %vm746, %v1063
  %1110 = vst.msk [vmem:[%s11 + $0x48] sm:$0xff] %vm746, %v1068
  %1111 = vst.msk [vmem:[%s11 + $0x50] sm:$0xff] %vm746, %v1073
  %1112 = vst.msk [vmem:[%s11 + $0x58] sm:$0xff] %vm746, %v1078
  %1113 = vst.msk [vmem:[%s11 + $0x60] sm:$0xff] %vm746, %v1083
  %1114 = vst.msk [vmem:[%s11 + $0x68] sm:$0xff] %vm746, %v1088
  %1115 = vst.msk [vmem:[%s11 + $0x70] sm:$0xff] %vm746, %v1093
  %1116 = vst.msk [vmem:[%s11 + $0x78] sm:$0xff] %vm746, %v1098
  // Predicated region
  $region46: #{tpu_custom_call.1} parent=0 // pred_check
    _
  $region47: #{tpu_custom_call.1} parent=0 // pred_check_branch
    %1118 = sbr.rel (0) target = $region49
  $region48: #{tpu_custom_call.1} parent=0 // pred_region
    _
  $region49: #{tpu_custom_call.1} parent=0 // pred_fallthru
    _
  // Predicated region
  $region50: #{tpu_custom_call.1} parent=0 // pred_check
    _
  $region51: #{tpu_custom_call.1} parent=0 // pred_check_branch
    %1120 = sbr.rel (0) target = $region53
  $region52: #{tpu_custom_call.1} parent=0 // pred_region
    _
  $region53: #{tpu_custom_call.1} parent=0 // pred_fallthru
    _

</llo_original>
